<compile_context>
chip_gen: v6e
topology: v6e:2x2x1
jax: 0.10.0
libtpu: 0.0.40
codegen_flags: <defaults>
</compile_context>

<pallas_src>
import functools

import jax
import jax.numpy as jnp
from jax.experimental import pallas as pl
from jax.experimental.pallas import tpu as pltpu

LN_EPS = 1e-5


def _round_up(n, m):
    return ((n + m - 1) // m) * m


def _layernorm(h, gamma, beta):
    # PyTorch nn.LayerNorm: biased variance over the last dim, eps inside sqrt.
    # Statistics stay in f32 regardless of the parameter dtype.
    mean = jnp.mean(h, axis=-1, keepdims=True)
    var = jnp.mean(jnp.square(h - mean), axis=-1, keepdims=True)
    inv = jax.lax.rsqrt(var + LN_EPS)
    return (h - mean) * inv * gamma.astype(jnp.float32) + beta.astype(jnp.float32)


def state_encoder_kernel(x_ref, w1_ref, vec_ref, w2_ref, w3_ref, b3_ref, out_ref):
    cdt = w1_ref.dtype                      # MXU feed dtype (bf16 path if params are bf16)
    vecs = vec_ref[...].astype(jnp.float32)  # (8, hidden): b1,g1,be1,b2,g2,be2,0,0

    # Layer 1: Linear(state_dim -> hidden) + LayerNorm + ReLU
    h = jnp.dot(x_ref[...].astype(cdt), w1_ref[...],
                preferred_element_type=jnp.float32)
    h = h + vecs[0:1, :]
    h = _layernorm(h, vecs[1:2, :], vecs[2:3, :])
    h = jnp.maximum(h, 0.0)

    # Layer 2: Linear(hidden -> hidden) + LayerNorm + ReLU
    h = jnp.dot(h.astype(cdt), w2_ref[...], preferred_element_type=jnp.float32)
    h = h + vecs[3:4, :]
    h = _layernorm(h, vecs[4:5, :], vecs[5:6, :])
    h = jnp.maximum(h, 0.0)

    # Output: Linear(hidden -> latent_padded) + Tanh.  latent is zero-padded to
    # a 128-lane multiple, so the store is an unmasked lane-dense vst; padded
    # columns hold tanh(0) = 0 and are sliced off in the wrapper.
    h = jnp.dot(h.astype(cdt), w3_ref[...], preferred_element_type=jnp.float32)
    h = h + b3_ref[...].astype(jnp.float32)
    out_ref[...] = jnp.tanh(h).astype(out_ref.dtype)


def _vmem_bytes(tile_b, state_dim, hidden, latent_p, x_dt, p_dt, o_dt):
    """Rough VMEM footprint of the pipelined kernel (lane/sublane padded)."""
    def tile(r, c, dt):
        it = jnp.dtype(dt).itemsize
        return _round_up(r, 8) * _round_up(c, 128) * it

    dbl = 2  # every pipelined operand is double-buffered by default
    b = dbl * tile(tile_b, state_dim, x_dt)                       # x tile
    b += dbl * (tile(state_dim, hidden, p_dt) + tile(8, hidden, p_dt)
                + tile(hidden, hidden, p_dt) + tile(hidden, latent_p, p_dt)
                + tile(1, latent_p, p_dt))                        # weights/vecs
    b += dbl * tile(tile_b, latent_p, o_dt)                       # out tile
    b += 4 * tile(tile_b, hidden, jnp.float32)                    # live f32 activations
    return b


@functools.partial(jax.jit, static_argnames=("latent_dim", "tile_b"))
def state_encoder_forward(x, prepped, latent_dim, tile_b=None):
    """Pallas forward pass of StateEncoder (use_projection=True path)."""
    B, state_dim = x.shape
    hidden = prepped["w1"].shape[1]
    latent_p = prepped["w3"].shape[1]          # lane-padded latent (multiple of 128)

    # --- batch tile: dtype-aware sublane packing, >=2 grid steps when B allows
    pack = max(8, 32 // jnp.dtype(x.dtype).itemsize)   # 8 f32, 16 bf16, 32 int8
    if tile_b is None:
        if B >= 2 * pack:
            # At least two grid steps so ("parallel",) shards across v7x's 2 TCs.
            tile_b = min(128, _round_up(-(-B // 2), pack))
        else:
            tile_b = _round_up(max(B, 1), pack)
    else:
        tile_b = max(pack, _round_up(int(tile_b), pack))

    # Ragged last block is fine: rows are independent (per-row LN / tanh) and
    # out-of-bounds output rows are masked on writeback.  No jnp.pad of x.
    grid = (pl.cdiv(B, tile_b),)

    def invariant(shape):
        # Grid-invariant weight / per-feature blocks (same block every step;
        # the Mosaic pipeline does not re-issue their DMAs).
        return pl.BlockSpec(shape, lambda i: (0,) * len(shape))

    # --- advisory cost estimate for XLA's scheduler -------------------------
    x_it = jnp.dtype(x.dtype).itemsize
    p_bytes = sum(int(v.size) * jnp.dtype(v.dtype).itemsize
                  for v in prepped.values())
    cost = pl.CostEstimate(
        flops=2 * B * (state_dim * hidden + hidden * hidden + hidden * latent_p),
        transcendentals=B * (latent_p + 2),    # tanh row + 2 rsqrt per row
        bytes_accessed=B * state_dim * x_it + p_bytes + B * latent_p * x_it,
    )

    # --- VMEM budget (lifts v5e's 16 MiB scoped default, stays within v7x's
    # 64 MiB physical VMEM) ---------------------------------------------------
    est = _vmem_bytes(tile_b, state_dim, hidden, latent_p,
                      x.dtype, prepped["w1"].dtype, x.dtype)
    vmem_limit = int(min(max(2 * est, 32 << 20), 64 << 20))

    out = pl.pallas_call(
        state_encoder_kernel,
        out_shape=jax.ShapeDtypeStruct((B, latent_p), x.dtype),
        grid_spec=pltpu.PrefetchScalarGridSpec(
            num_scalar_prefetch=0,
            grid=grid,
            in_specs=[
                pl.BlockSpec((tile_b, state_dim), lambda i: (i, 0)),  # x (K unpadded)
                invariant((state_dim, hidden)),                       # w1
                invariant((8, hidden)),                               # b1,g1,be1,b2,g2,be2 slab
                invariant((hidden, hidden)),                          # w2
                invariant((hidden, latent_p)),                        # w3 (lane-padded)
                invariant((1, latent_p)),                             # b3 (lane-padded)
            ],
            out_specs=pl.BlockSpec((tile_b, latent_p), lambda i: (i, 0)),
        ),
        compiler_params=pltpu.CompilerParams(
            dimension_semantics=("parallel",),
            vmem_limit_bytes=vmem_limit,
        ),
        cost_estimate=cost,
    )(x, prepped["w1"], prepped["vecs"], prepped["w2"],
      prepped["w3"], prepped["b3"])

    if latent_p != latent_dim:
        out = out[:, :latent_dim]
    return out


def prepare_params(params):
    """One-time repacking (outside the per-call jit):
       * w3/b3 zero-padded on the output dim to a multiple of 128 (lane-dense
         final store; tanh(0)=0 and no LN follows, so results are unchanged),
       * the six (1, hidden) vectors packed into a single (8, hidden) slab.
    Hidden is NOT padded (LayerNorm statistics must see exactly `hidden` cols).
    """
    hidden = params["w1"].shape[1]
    latent = params["w3"].shape[1]
    latent_p = _round_up(latent, 128)
    pad = latent_p - latent
    w3p = jnp.pad(params["w3"], ((0, 0), (0, pad)))
    b3p = jnp.pad(params["b3"], ((0, 0), (0, pad)))
    vecs = jnp.concatenate(
        [params["b1"], params["g1"], params["be1"],
         params["b2"], params["g2"], params["be2"],
         jnp.zeros((2, hidden), params["b1"].dtype)], axis=0)      # (8, hidden)
    return {"w1": params["w1"], "vecs": vecs, "w2": params["w2"],
            "w3": w3p, "b3": b3p}


def init_params(key, state_dim, hidden_dim, latent_dim, dtype=jnp.float32):
    """Deterministic synthetic init (Kaiming-uniform-ish linears, LN gamma=1 /
    beta=0), matching the PyTorch module's shapes."""
    ks = jax.random.split(key, 6)

    def linear(kw, kb, fan_in, fan_out):
        bound = 1.0 / jnp.sqrt(fan_in)
        w = jax.random.uniform(kw, (fan_in, fan_out), dtype, -bound, bound)
        b = jax.random.uniform(kb, (1, fan_out), dtype, -bound, bound)
        return w, b

    w1, b1 = linear(ks[0], ks[1], state_dim, hidden_dim)
    w2, b2 = linear(ks[2], ks[3], hidden_dim, hidden_dim)
    w3, b3 = linear(ks[4], ks[5], hidden_dim, latent_dim)
    return {
        "w1": w1, "b1": b1,
        "g1": jnp.ones((1, hidden_dim), dtype), "be1": jnp.zeros((1, hidden_dim), dtype),
        "w2": w2, "b2": b2,
        "g2": jnp.ones((1, hidden_dim), dtype), "be2": jnp.zeros((1, hidden_dim), dtype),
        "w3": w3, "b3": b3,
    }


def state_encoder_ref(x, params):
    """Pure-JAX reference (HIGHEST matmul precision to match the kernel's f32
    accumulation)."""
    hp = jax.lax.Precision.HIGHEST
    h = jnp.dot(x, params["w1"], precision=hp) + params["b1"]
    h = _layernorm(h, params["g1"], params["be1"])
    h = jnp.maximum(h, 0.0)
    h = jnp.dot(h, params["w2"], precision=hp) + params["b2"]
    h = _layernorm(h, params["g2"], params["be2"])
    h = jnp.maximum(h, 0.0)
    return jnp.tanh(jnp.dot(h, params["w3"], precision=hp) + params["b3"])


if __name__ == "__main__":
    # Small shapes consistent with the module:
    # StateEncoder(state_dim=24, latent_dim=32, hidden_dim=64, num_layers=2)
    B, STATE_DIM, HIDDEN_DIM, LATENT_DIM = 16, 24, 64, 32

    key = jax.random.PRNGKey(0)
    kx, kp = jax.random.split(key)
    x = jax.random.normal(kx, (B, STATE_DIM), jnp.float32)
    params = init_params(kp, STATE_DIM, HIDDEN_DIM, LATENT_DIM)
    prepped = prepare_params(params)   # one-time param repacking

    out = jax.block_until_ready(state_encoder_forward(x, prepped, LATENT_DIM))
    ref = state_encoder_ref(x, params)
    assert out.shape == (B, LATENT_DIM)
    assert float(jnp.max(jnp.abs(out - ref))) < 1e-3

    # Ragged-batch path (B not a multiple of the tile): no wrapper-side padding.
    B2 = 13
    x2 = jax.random.normal(jax.random.PRNGKey(1), (B2, STATE_DIM), jnp.float32)
    out2 = jax.block_until_ready(state_encoder_forward(x2, prepped, LATENT_DIM))
    ref2 = state_encoder_ref(x2, params)
    assert out2.shape == (B2, LATENT_DIM)
    assert float(jnp.max(jnp.abs(out2 - ref2))) < 1e-3

    print("KERNEL_OK")
</pallas_src>

<mosaic_0001>
module attributes {stable_mosaic.version = 11 : i64} {
  func.func @state_encoder_kernel(%arg0: i32, %arg1: memref<8x24xf32, #tpu.memory_space<vmem>>, %arg2: memref<24x64xf32, #tpu.memory_space<vmem>>, %arg3: memref<8x64xf32, #tpu.memory_space<vmem>>, %arg4: memref<64x64xf32, #tpu.memory_space<vmem>>, %arg5: memref<64x128xf32, #tpu.memory_space<vmem>>, %arg6: memref<1x128xf32, #tpu.memory_space<vmem>>, %arg7: memref<8x128xf32, #tpu.memory_space<vmem>>) attributes {dimension_semantics = [#tpu.dimension_semantics<parallel>], iteration_bounds = array<i64: 2>, scalar_prefetch = 0 : i64, scratch_operands = 0 : i64, tpu.core_type = #tpu.core_type<tc>, window_params = [{transform_indices = @transform_0, window_bounds = array<i64: 8, 24>}, {pipeline_mode = #tpu.pipeline_mode<synchronous>, transform_indices = @transform_1, window_bounds = array<i64: 24, 64>}, {pipeline_mode = #tpu.pipeline_mode<synchronous>, transform_indices = @transform_2, window_bounds = array<i64: 8, 64>}, {pipeline_mode = #tpu.pipeline_mode<synchronous>, transform_indices = @transform_3, window_bounds = array<i64: 64, 64>}, {pipeline_mode = #tpu.pipeline_mode<synchronous>, transform_indices = @transform_4, window_bounds = array<i64: 64, 128>}, {pipeline_mode = #tpu.pipeline_mode<synchronous>, transform_indices = @transform_5, window_bounds = array<i64: 1, 128>}, {transform_indices = @transform_6, window_bounds = array<i64: 8, 128>}]} {
    %c0 = arith.constant 0 : index
    %c0_0 = arith.constant 0 : index
    %0 = vector.load %arg3[%c0, %c0_0] : memref<8x64xf32, #tpu.memory_space<vmem>>, vector<8x64xf32>
    %c0_1 = arith.constant 0 : index
    %c0_2 = arith.constant 0 : index
    %1 = vector.load %arg1[%c0_1, %c0_2] : memref<8x24xf32, #tpu.memory_space<vmem>>, vector<8x24xf32>
    %c0_3 = arith.constant 0 : index
    %c0_4 = arith.constant 0 : index
    %2 = vector.load %arg2[%c0_3, %c0_4] : memref<24x64xf32, #tpu.memory_space<vmem>>, vector<24x64xf32>
    %cst = arith.constant dense<0.000000e+00> : vector<8x64xf32>
    %3 = tpu.matmul %1, %2, %cst {dimension_numbers = #tpu.dot_dimension_numbers<[1], [0], [0], [1], [0, 0, 1, 1], [], []>} : vector<8x24xf32>, vector<24x64xf32>, vector<8x64xf32> -> vector<8x64xf32>
    %4 = vector.extract_strided_slice %0 {offsets = [0, 0], sizes = [1, 64], strides = [1, 1]} : vector<8x64xf32> to vector<1x64xf32>
    %5 = vector.broadcast %4 : vector<1x64xf32> to vector<8x64xf32>
    %6 = arith.addf %3, %5 : vector<8x64xf32>
    %7 = vector.extract_strided_slice %0 {offsets = [1, 0], sizes = [1, 64], strides = [1, 1]} : vector<8x64xf32> to vector<1x64xf32>
    %8 = vector.extract_strided_slice %0 {offsets = [2, 0], sizes = [1, 64], strides = [1, 1]} : vector<8x64xf32> to vector<1x64xf32>
    %cst_5 = arith.constant dense<0.000000e+00> : vector<8xf32>
    %9 = vector.multi_reduction <add>, %6, %cst_5 [1] : vector<8x64xf32> to vector<8xf32>
    %10 = vector.shape_cast %9 : vector<8xf32> to vector<8x1xf32>
    %cst_6 = arith.constant 6.400000e+01 : f32
    %11 = vector.broadcast %cst_6 : f32 to vector<8x1xf32>
    %12 = arith.divf %10, %11 : vector<8x1xf32>
    %13 = vector.broadcast %12 : vector<8x1xf32> to vector<8x64xf32>
    %14 = arith.subf %6, %13 : vector<8x64xf32>
    %15 = arith.mulf %14, %14 : vector<8x64xf32>
    %cst_7 = arith.constant dense<0.000000e+00> : vector<8xf32>
    %16 = vector.multi_reduction <add>, %15, %cst_7 [1] : vector<8x64xf32> to vector<8xf32>
    %17 = vector.shape_cast %16 : vector<8xf32> to vector<8x1xf32>
    %cst_8 = arith.constant 6.400000e+01 : f32
    %18 = vector.broadcast %cst_8 : f32 to vector<8x1xf32>
    %19 = arith.divf %17, %18 : vector<8x1xf32>
    %cst_9 = arith.constant 9.99999974E-6 : f32
    %20 = vector.broadcast %cst_9 : f32 to vector<8x1xf32>
    %21 = arith.addf %19, %20 : vector<8x1xf32>
    %22 = math.rsqrt %21 : vector<8x1xf32>
    %23 = vector.broadcast %12 : vector<8x1xf32> to vector<8x64xf32>
    %24 = arith.subf %6, %23 : vector<8x64xf32>
    %25 = vector.broadcast %22 : vector<8x1xf32> to vector<8x64xf32>
    %26 = arith.mulf %24, %25 : vector<8x64xf32>
    %27 = vector.broadcast %7 : vector<1x64xf32> to vector<8x64xf32>
    %28 = arith.mulf %26, %27 : vector<8x64xf32>
    %29 = vector.broadcast %8 : vector<1x64xf32> to vector<8x64xf32>
    %30 = arith.addf %28, %29 : vector<8x64xf32>
    %cst_10 = arith.constant 0.000000e+00 : f32
    %31 = vector.broadcast %cst_10 : f32 to vector<8x64xf32>
    %32 = arith.maximumf %30, %31 : vector<8x64xf32>
    %c0_11 = arith.constant 0 : index
    %c0_12 = arith.constant 0 : index
    %33 = vector.load %arg4[%c0_11, %c0_12] : memref<64x64xf32, #tpu.memory_space<vmem>>, vector<64x64xf32>
    %cst_13 = arith.constant dense<0.000000e+00> : vector<8x64xf32>
    %34 = tpu.matmul %32, %33, %cst_13 {dimension_numbers = #tpu.dot_dimension_numbers<[1], [0], [0], [1], [0, 0, 1, 1], [], []>} : vector<8x64xf32>, vector<64x64xf32>, vector<8x64xf32> -> vector<8x64xf32>
    %35 = vector.extract_strided_slice %0 {offsets = [3, 0], sizes = [1, 64], strides = [1, 1]} : vector<8x64xf32> to vector<1x64xf32>
    %36 = vector.broadcast %35 : vector<1x64xf32> to vector<8x64xf32>
    %37 = arith.addf %34, %36 : vector<8x64xf32>
    %38 = vector.extract_strided_slice %0 {offsets = [4, 0], sizes = [1, 64], strides = [1, 1]} : vector<8x64xf32> to vector<1x64xf32>
    %39 = vector.extract_strided_slice %0 {offsets = [5, 0], sizes = [1, 64], strides = [1, 1]} : vector<8x64xf32> to vector<1x64xf32>
    %cst_14 = arith.constant dense<0.000000e+00> : vector<8xf32>
    %40 = vector.multi_reduction <add>, %37, %cst_14 [1] : vector<8x64xf32> to vector<8xf32>
    %41 = vector.shape_cast %40 : vector<8xf32> to vector<8x1xf32>
    %cst_15 = arith.constant 6.400000e+01 : f32
    %42 = vector.broadcast %cst_15 : f32 to vector<8x1xf32>
    %43 = arith.divf %41, %42 : vector<8x1xf32>
    %44 = vector.broadcast %43 : vector<8x1xf32> to vector<8x64xf32>
    %45 = arith.subf %37, %44 : vector<8x64xf32>
    %46 = arith.mulf %45, %45 : vector<8x64xf32>
    %cst_16 = arith.constant dense<0.000000e+00> : vector<8xf32>
    %47 = vector.multi_reduction <add>, %46, %cst_16 [1] : vector<8x64xf32> to vector<8xf32>
    %48 = vector.shape_cast %47 : vector<8xf32> to vector<8x1xf32>
    %cst_17 = arith.constant 6.400000e+01 : f32
    %49 = vector.broadcast %cst_17 : f32 to vector<8x1xf32>
    %50 = arith.divf %48, %49 : vector<8x1xf32>
    %cst_18 = arith.constant 9.99999974E-6 : f32
    %51 = vector.broadcast %cst_18 : f32 to vector<8x1xf32>
    %52 = arith.addf %50, %51 : vector<8x1xf32>
    %53 = math.rsqrt %52 : vector<8x1xf32>
    %54 = vector.broadcast %43 : vector<8x1xf32> to vector<8x64xf32>
    %55 = arith.subf %37, %54 : vector<8x64xf32>
    %56 = vector.broadcast %53 : vector<8x1xf32> to vector<8x64xf32>
    %57 = arith.mulf %55, %56 : vector<8x64xf32>
    %58 = vector.broadcast %38 : vector<1x64xf32> to vector<8x64xf32>
    %59 = arith.mulf %57, %58 : vector<8x64xf32>
    %60 = vector.broadcast %39 : vector<1x64xf32> to vector<8x64xf32>
    %61 = arith.addf %59, %60 : vector<8x64xf32>
    %cst_19 = arith.constant 0.000000e+00 : f32
    %62 = vector.broadcast %cst_19 : f32 to vector<8x64xf32>
    %63 = arith.maximumf %61, %62 : vector<8x64xf32>
    %c0_20 = arith.constant 0 : index
    %c0_21 = arith.constant 0 : index
    %64 = vector.load %arg5[%c0_20, %c0_21] : memref<64x128xf32, #tpu.memory_space<vmem>>, vector<64x128xf32>
    %cst_22 = arith.constant dense<0.000000e+00> : vector<8x128xf32>
    %65 = tpu.matmul %63, %64, %cst_22 {dimension_numbers = #tpu.dot_dimension_numbers<[1], [0], [0], [1], [0, 0, 1, 1], [], []>} : vector<8x64xf32>, vector<64x128xf32>, vector<8x128xf32> -> vector<8x128xf32>
    %c0_23 = arith.constant 0 : index
    %c0_24 = arith.constant 0 : index
    %66 = vector.load %arg6[%c0_23, %c0_24] : memref<1x128xf32, #tpu.memory_space<vmem>>, vector<1x128xf32>
    %67 = vector.broadcast %66 : vector<1x128xf32> to vector<8x128xf32>
    %68 = arith.addf %65, %67 : vector<8x128xf32>
    %69 = math.tanh %68 : vector<8x128xf32>
    %c0_25 = arith.constant 0 : index
    %c0_26 = arith.constant 0 : index
    %70 = vector.load %arg7[%c0_25, %c0_26] : memref<8x128xf32, #tpu.memory_space<vmem>>, vector<8x128xf32>
    tpu.vector_store %arg7[%c0_25, %c0_26], %69 {strides = array<i32>} : memref<8x128xf32, #tpu.memory_space<vmem>>, vector<8x128xf32>,
    return
  }
  func.func @transform_0(%arg0: i32) -> (i32, i32) {
    %c0_i32 = arith.constant 0 : i32
    %c0_i32_0 = arith.constant 0 : i32
    return %arg0, %c0_i32 : i32, i32
  }
  func.func @transform_1(%arg0: i32) -> (i32, i32) {
    %c0_i32 = arith.constant 0 : i32
    %c0_i32_0 = arith.constant 0 : i32
    %c0_i32_1 = arith.constant 0 : i32
    return %c0_i32, %c0_i32_0 : i32, i32
  }
  func.func @transform_2(%arg0: i32) -> (i32, i32) {
    %c0_i32 = arith.constant 0 : i32
    %c0_i32_0 = arith.constant 0 : i32
    %c0_i32_1 = arith.constant 0 : i32
    return %c0_i32, %c0_i32_0 : i32, i32
  }
  func.func @transform_3(%arg0: i32) -> (i32, i32) {
    %c0_i32 = arith.constant 0 : i32
    %c0_i32_0 = arith.constant 0 : i32
    %c0_i32_1 = arith.constant 0 : i32
    return %c0_i32, %c0_i32_0 : i32, i32
  }
  func.func @transform_4(%arg0: i32) -> (i32, i32) {
    %c0_i32 = arith.constant 0 : i32
    %c0_i32_0 = arith.constant 0 : i32
    %c0_i32_1 = arith.constant 0 : i32
    return %c0_i32, %c0_i32_0 : i32, i32
  }
  func.func @transform_5(%arg0: i32) -> (i32, i32) {
    %c0_i32 = arith.constant 0 : i32
    %c0_i32_0 = arith.constant 0 : i32
    %c0_i32_1 = arith.constant 0 : i32
    return %c0_i32, %c0_i32_0 : i32, i32
  }
  func.func @transform_6(%arg0: i32) -> (i32, i32) {
    %c0_i32 = arith.constant 0 : i32
    %c0_i32_0 = arith.constant 0 : i32
    return %arg0, %c0_i32 : i32, i32
  }
}

</mosaic_0001>

<llo_original>
// kernel: state_encoder_forward.1
$region0: #{state_encoder_forward.1}
  #allocation0 [shape = 'u32[]', space=smem, size = 0x4, offset = 0x4, fixed_abs, tag = 'smem constant byte address 0x4 - core index']
  #allocation1 [shape = 'u32[144,128]{1,0:T(1,128)}', space=vmem, size = 0x12000, scoped, tag = 'internal scratch']
  %s0 = inlined_call_operand.hbm [shape: f32[16,24], index: 0, kind: input, shape index: {}]
  %s1 = inlined_call_operand.hbm [shape: f32[24,64], index: 1, kind: input, shape index: {}]
  %s2 = inlined_call_operand.hbm [shape: f32[8,64], index: 2, kind: input, shape index: {}]
  %s3 = inlined_call_operand.hbm [shape: f32[64,64], index: 3, kind: input, shape index: {}]
  %s4 = inlined_call_operand.hbm [shape: f32[64,128], index: 4, kind: input, shape index: {}]
  %s5 = inlined_call_operand.vmem [shape: f32[1,128], index: 5, kind: input, shape index: {}]
  %s6 = inlined_call_operand.hbm [shape: f32[16,128], index: 6, kind: output, shape index: {}]
  %s7 = sld [smem:[#allocation0]]
  $region77: #{state_encoder_forward.1} parent=0
    _
  %s9 = ssub.s32 1, %s7
  %s10 = scalar_select 0, %s9, %s7
  $region1: #{state_encoder_forward.1} parent=0
    #allocation2 [shape = 'u8[8192]{0}', space=vmem, size = 0x2000, scoped, tag = 'input window, operand 0']
    #allocation3 [shape = 's32[2]{0}', space=sflag, size = 0x8, scoped, tag = 'scoped memory for state_encoder_forward.1']
    #allocation4 [shape = 's32[2]{0}', space=sflag, size = 0x8, scoped, tag = 'scoped memory for state_encoder_forward.1']
    #allocation5 [shape = 'u8[12288]{0}', space=vmem, size = 0x3000, scoped, tag = 'input window, operand 1, single buffered']
    #allocation6 [shape = 's32[1]{0}', space=sflag, size = 0x4, scoped, tag = 'scoped memory for state_encoder_forward.1']
    #allocation7 [shape = 'u8[4096]{0}', space=vmem, size = 0x1000, scoped, tag = 'input window, operand 2, single buffered']
    #allocation8 [shape = 'u8[32768]{0}', space=vmem, size = 0x8000, scoped, tag = 'input window, operand 3, single buffered']
    #allocation9 [shape = 's32[1]{0}', space=sflag, size = 0x4, scoped, tag = 'scoped memory for state_encoder_forward.1']
    #allocation10 [shape = 'u8[32768]{0}', space=vmem, size = 0x8000, scoped, tag = 'input window, operand 4, single buffered']
    #allocation11 [shape = 'u8[8192]{0}', space=vmem, size = 0x2000, scoped, tag = 'output window, operand 0']
    %11 = vsyncpa [#allocation3], 0
    %s12 = scalar_lea.sflag [#allocation3], 1
    %13 = vsyncpa %s12, 0
    %14 = vsyncpa [#allocation6], 0
    %15 = vsyncpa [#allocation9], 0
    %16 = vsyncpa [#allocation4], 0
    %s17 = scalar_lea.sflag [#allocation4], 1
    %18 = vsyncpa %s17, 0
    loop: start=0, step=1, limit=4
    $region2: #{state_encoder_forward.1} parent=1 // loop_pre_header
      _
    $region3: #{state_encoder_forward.1} parent=1 // loop_header
      %s20 = sphi 0, %s24
      %p21 = scmp.ge.s32.totalorder %s20, 4
      %s30 = sphi 0, %s32
      %s33 = sphi 0, %s30
      %s34 = sphi 0, %s33
      %s50 = sphi 0, %s34
      %s54 = sphi 0, %s54
      %s56 = sphi 0, %s54
      %s57 = sphi 0, %s56
      %s71 = sphi 0, %s57
      %s75 = sphi 0, %s75
      %s77 = sphi 0, %s75
      %s78 = sphi 0, %s77
      %s92 = sphi 0, %s78
      %s96 = sphi 0, %s96
      %s98 = sphi 0, %s96
      %s99 = sphi 0, %s98
      %s113 = sphi 0, %s99
      %s117 = sphi 0, %s117
      %s119 = sphi 0, %s117
      %s120 = sphi 0, %s119
      %s134 = sphi 0, %s120
      %s138 = sphi 0, %s138
      %s140 = sphi 0, %s138
      %s141 = sphi 0, %s140
      %s155 = sphi 0, %s141
      %s161 = sphi 0, %s163
      %s164 = sphi 0, %s161
      %s165 = sphi 0, %s164
      %s181 = sphi 0, %s165
    $region4: #{state_encoder_forward.1} parent=1 // loop_header_branch
      %23 = sbr.rel (%p21) target = $region8
    $region5: #{state_encoder_forward.1} parent=1 // loop_body
      %s25 = ssub.s32 %s20, 1
      %s26 = ssub.s32 %s20, 2
      %s27 = sadd.s32 %s20, 1
      %s28 = ssub.s32 %s20, %s27
      %p29 = scmp.eq.s32.totalorder %s28, 0
      %s31 = sadd.s32 %s30, 1
      %s32 = scalar_select %p29, %s30, %s31
      %p35 = pneg %p29
      %p36 = scmp.eq.s32.totalorder %s20, 1
      %p37 = por %p35, %p36
      %p38 = scmp.ne.s32.totalorder %s30, %s33
      %p39 = scmp.eq.s32.totalorder %s20, 0
      %p40 = por %p38, %p39
      %p41 = scmp.ne.s32.totalorder %s30, %s33
      %p42 = scmp.eq.s32.totalorder %s25, 1
      %p43 = por %p41, %p42
      %p44 = scmp.ne.s32.totalorder %s33, %s34
      %p45 = scmp.eq.s32.totalorder %s25, 0
      %p46 = por %p44, %p45
      %p47 = scmp.ne.s32.totalorder %s33, %s34
      %p48 = scmp.eq.s32.totalorder %s26, 1
      %p49 = por %p47, %p48
      %p51 = scmp.ne.s32.totalorder %s34, %s50
      %p52 = scmp.eq.s32.totalorder %s26, 0
      %p53 = por %p51, %p52
      %s55 = sadd.s32 %s54, 1
      %p58 = scmp.eq.s32.totalorder %s20, 1
      %p59 = scmp.ne.s32.totalorder %s54, %s56
      %p60 = scmp.eq.s32.totalorder %s20, 0
      %p61 = por %p59, %p60
      %p62 = scmp.ne.s32.totalorder %s54, %s56
      %p63 = scmp.eq.s32.totalorder %s25, 1
      %p64 = por %p62, %p63
      %p65 = scmp.ne.s32.totalorder %s56, %s57
      %p66 = scmp.eq.s32.totalorder %s25, 0
      %p67 = por %p65, %p66
      %p68 = scmp.ne.s32.totalorder %s56, %s57
      %p69 = scmp.eq.s32.totalorder %s26, 1
      %p70 = por %p68, %p69
      %p72 = scmp.ne.s32.totalorder %s57, %s71
      %p73 = scmp.eq.s32.totalorder %s26, 0
      %p74 = por %p72, %p73
      %s76 = sadd.s32 %s75, 1
      %p79 = scmp.eq.s32.totalorder %s20, 1
      %p80 = scmp.ne.s32.totalorder %s75, %s77
      %p81 = scmp.eq.s32.totalorder %s20, 0
      %p82 = por %p80, %p81
      %p83 = scmp.ne.s32.totalorder %s75, %s77
      %p84 = scmp.eq.s32.totalorder %s25, 1
      %p85 = por %p83, %p84
      %p86 = scmp.ne.s32.totalorder %s77, %s78
      %p87 = scmp.eq.s32.totalorder %s25, 0
      %p88 = por %p86, %p87
      %p89 = scmp.ne.s32.totalorder %s77, %s78
      %p90 = scmp.eq.s32.totalorder %s26, 1
      %p91 = por %p89, %p90
      %p93 = scmp.ne.s32.totalorder %s78, %s92
      %p94 = scmp.eq.s32.totalorder %s26, 0
      %p95 = por %p93, %p94
      %s97 = sadd.s32 %s96, 1
      %p100 = scmp.eq.s32.totalorder %s20, 1
      %p101 = scmp.ne.s32.totalorder %s96, %s98
      %p102 = scmp.eq.s32.totalorder %s20, 0
      %p103 = por %p101, %p102
      %p104 = scmp.ne.s32.totalorder %s96, %s98
      %p105 = scmp.eq.s32.totalorder %s25, 1
      %p106 = por %p104, %p105
      %p107 = scmp.ne.s32.totalorder %s98, %s99
      %p108 = scmp.eq.s32.totalorder %s25, 0
      %p109 = por %p107, %p108
      %p110 = scmp.ne.s32.totalorder %s98, %s99
      %p111 = scmp.eq.s32.totalorder %s26, 1
      %p112 = por %p110, %p111
      %p114 = scmp.ne.s32.totalorder %s99, %s113
      %p115 = scmp.eq.s32.totalorder %s26, 0
      %p116 = por %p114, %p115
      %s118 = sadd.s32 %s117, 1
      %p121 = scmp.eq.s32.totalorder %s20, 1
      %p122 = scmp.ne.s32.totalorder %s117, %s119
      %p123 = scmp.eq.s32.totalorder %s20, 0
      %p124 = por %p122, %p123
      %p125 = scmp.ne.s32.totalorder %s117, %s119
      %p126 = scmp.eq.s32.totalorder %s25, 1
      %p127 = por %p125, %p126
      %p128 = scmp.ne.s32.totalorder %s119, %s120
      %p129 = scmp.eq.s32.totalorder %s25, 0
      %p130 = por %p128, %p129
      %p131 = scmp.ne.s32.totalorder %s119, %s120
      %p132 = scmp.eq.s32.totalorder %s26, 1
      %p133 = por %p131, %p132
      %p135 = scmp.ne.s32.totalorder %s120, %s134
      %p136 = scmp.eq.s32.totalorder %s26, 0
      %p137 = por %p135, %p136
      %s139 = sadd.s32 %s138, 1
      %p142 = scmp.eq.s32.totalorder %s20, 1
      %p143 = scmp.ne.s32.totalorder %s138, %s140
      %p144 = scmp.eq.s32.totalorder %s20, 0
      %p145 = por %p143, %p144
      %p146 = scmp.ne.s32.totalorder %s138, %s140
      %p147 = scmp.eq.s32.totalorder %s25, 1
      %p148 = por %p146, %p147
      %p149 = scmp.ne.s32.totalorder %s140, %s141
      %p150 = scmp.eq.s32.totalorder %s25, 0
      %p151 = por %p149, %p150
      %p152 = scmp.ne.s32.totalorder %s140, %s141
      %p153 = scmp.eq.s32.totalorder %s26, 1
      %p154 = por %p152, %p153
      %p156 = scmp.ne.s32.totalorder %s141, %s155
      %p157 = scmp.eq.s32.totalorder %s26, 0
      %p158 = por %p156, %p157
      %s159 = ssub.s32 %s20, %s27
      %p160 = scmp.eq.s32.totalorder %s159, 0
      %s162 = sadd.s32 %s161, 1
      %s163 = scalar_select %p160, %s161, %s162
      %p166 = pneg %p160
      %p167 = scmp.eq.s32.totalorder %s20, 1
      %p168 = por %p166, %p167
      %p169 = scmp.ne.s32.totalorder %s161, %s164
      %p170 = scmp.eq.s32.totalorder %s20, 0
      %p171 = por %p169, %p170
      %p172 = scmp.ne.s32.totalorder %s161, %s164
      %p173 = scmp.eq.s32.totalorder %s25, 1
      %p174 = por %p172, %p173
      %p175 = scmp.ne.s32.totalorder %s164, %s165
      %p176 = scmp.eq.s32.totalorder %s25, 0
      %p177 = por %p175, %p176
      %p178 = scmp.ne.s32.totalorder %s164, %s165
      %p179 = scmp.eq.s32.totalorder %s26, 1
      %p180 = por %p178, %p179
      %p182 = scmp.ne.s32.totalorder %s165, %s181
      %p183 = scmp.eq.s32.totalorder %s26, 0
      %p184 = por %p182, %p183
      %p185 = scmp.le.s32.totalorder 1, %s20
      %p186 = scmp.lt.s32.totalorder %s20, 3
      %p187 = pnand %p185, %p186
      %p188 = pneg %p187
      // Predicated region
      $region9: #{state_encoder_forward.1} parent=5 // pred_check
        _
      $region10: #{state_encoder_forward.1} parent=5 // pred_check_branch
        %190 = sbr.rel (%p187) target = $region12
      $region11: #{state_encoder_forward.1} parent=5 // pred_region
        %s191 = ssub.s32 %s20, 1
        // Predicated region
        $region13: #{state_encoder_forward.1} parent=11 // pred_check
          %p192 = pneg %p67
        $region14: #{state_encoder_forward.1} parent=11 // pred_check_branch
          %194 = sbr.rel (%p192) target = $region16
        $region15: #{state_encoder_forward.1} parent=11 // pred_region
          %s196 = ssub.s32 384, 384
          %197 = vsyncadd [#allocation6], %s196
          %s198 = sshll.u32 [#allocation5], 4
          %s199 = int_to_ptr.vmem [resolvable:$true] %s198
          %204 = dma.hbm_to_vmem [thread:$0]  %s1, 384, %s199, [#allocation6], 128, 128, 8
        $region16: #{state_encoder_forward.1} parent=11 // pred_fallthru
          _
        // Predicated region
        $region17: #{state_encoder_forward.1} parent=11 // pred_check
          %p205 = pneg %p88
        $region18: #{state_encoder_forward.1} parent=11 // pred_check_branch
          %207 = sbr.rel (%p205) target = $region20
        $region19: #{state_encoder_forward.1} parent=11 // pred_region
          %s209 = ssub.s32 128, 128
          %210 = vsyncadd [#allocation6], %s209
          %s212 = sshll.u32 [#allocation7], 4
          %s213 = int_to_ptr.vmem [resolvable:$true] %s212
          %215 = dma.hbm_to_vmem [thread:$0]  %s2, 128, %s213, [#allocation6]
        $region20: #{state_encoder_forward.1} parent=11 // pred_fallthru
          _
        // Predicated region
        $region21: #{state_encoder_forward.1} parent=11 // pred_check
          %p216 = pneg %p109
        $region22: #{state_encoder_forward.1} parent=11 // pred_check_branch
          %218 = sbr.rel (%p216) target = $region24
        $region23: #{state_encoder_forward.1} parent=11 // pred_region
          %s220 = ssub.s32 1024, 1024
          %221 = vsyncadd [#allocation9], %s220
          %s222 = sshll.u32 [#allocation8], 4
          %s223 = int_to_ptr.vmem [resolvable:$true] %s222
          %228 = dma.hbm_to_vmem [thread:$0]  %s3, 1024, %s223, [#allocation9], 128, 128, 8
        $region24: #{state_encoder_forward.1} parent=11 // pred_fallthru
          _
        // Predicated region
        $region25: #{state_encoder_forward.1} parent=11 // pred_check
          %p229 = pneg %p130
        $region26: #{state_encoder_forward.1} parent=11 // pred_check_branch
          %231 = sbr.rel (%p229) target = $region28
        $region27: #{state_encoder_forward.1} parent=11 // pred_region
          %s233 = ssub.s32 1024, 1024
          %234 = vsyncadd [#allocation9], %s233
          %s235 = sshll.u32 [#allocation10], 4
          %s236 = int_to_ptr.vmem [resolvable:$true] %s235
          %241 = dma.hbm_to_vmem [thread:$0]  %s4, 1024, %s236, [#allocation9], 128, 128, 8
        $region28: #{state_encoder_forward.1} parent=11 // pred_fallthru
          _
        // Predicated region
        $region29: #{state_encoder_forward.1} parent=11 // pred_check
          %p242 = pneg %p151
        $region30: #{state_encoder_forward.1} parent=11 // pred_check_branch
          %244 = sbr.rel (%p242) target = $region32
        $region31: #{state_encoder_forward.1} parent=11 // pred_region
          _
        $region32: #{state_encoder_forward.1} parent=11 // pred_fallthru
          _
      $region12: #{state_encoder_forward.1} parent=5 // pred_fallthru
        _
      %p245 = scmp.lt.s32.totalorder %s20, 2
      // Predicated region
      $region33: #{state_encoder_forward.1} parent=5 // pred_check
        %p246 = pneg %p245
      $region34: #{state_encoder_forward.1} parent=5 // pred_check_branch
        %248 = sbr.rel (%p246) target = $region36
      $region35: #{state_encoder_forward.1} parent=5 // pred_region
        // Predicated region
        $region37: #{state_encoder_forward.1} parent=35 // pred_check
          %p249 = pneg %p40
        $region38: #{state_encoder_forward.1} parent=35 // pred_check_branch
          %251 = sbr.rel (%p249) target = $region40
        $region39: #{state_encoder_forward.1} parent=35 // pred_region
          %s252 = sand.u32 %s30, 1
          %s253 = scalar_lea.sflag [#allocation3], %s252
          %s254 = sand.u32 %s30, 1
          %s255 = smul.addr %s254, 8
          %s256 = scalar_lea.vmem [#allocation2], %s255
          %s258 = ssub.s32 128, 128
          %259 = vsyncadd %s253, %s258
          %s260 = smul.addr %s20, 128
          %s261 = scalar_lea.hbm %s0, %s260
          %s263 = sshll.u32 %s256, 4
          %s264 = int_to_ptr.vmem [resolvable:$true] %s263
          %266 = dma.hbm_to_vmem [thread:$0]  %s261, 128, %s264, %s253
        $region40: #{state_encoder_forward.1} parent=35 // pred_fallthru
          _
      $region36: #{state_encoder_forward.1} parent=5 // pred_fallthru
        _
      %p267 = scmp.le.s32.totalorder 1, %s20
      %p268 = scmp.lt.s32.totalorder %s20, 3
      %p269 = pnand %p267, %p268
      %p270 = pneg %p269
      // Predicated region
      $region41: #{state_encoder_forward.1} parent=5 // pred_check
        _
      $region42: #{state_encoder_forward.1} parent=5 // pred_check_branch
        %272 = sbr.rel (%p269) target = $region44
      $region43: #{state_encoder_forward.1} parent=5 // pred_region
        %s273 = ssub.s32 %s20, 1
        %s274 = sand.u32 %s33, 1
        %s275 = scalar_lea.sflag [#allocation3], %s274
        %s276 = sand.u32 %s33, 1
        %s277 = smul.addr %s276, 8
        %s278 = scalar_lea.vmem [#allocation2], %s277
        // Predicated region
        $region45: #{state_encoder_forward.1} parent=43 // pred_check
          %p279 = pneg %p46
        $region46: #{state_encoder_forward.1} parent=43 // pred_check_branch
          %281 = sbr.rel (%p279) target = $region48
        $region47: #{state_encoder_forward.1} parent=43 // pred_region
          %282 = dma.done %s275, 128
        $region48: #{state_encoder_forward.1} parent=43 // pred_fallthru
          _
        // Predicated region
        $region49: #{state_encoder_forward.1} parent=43 // pred_check
          %p283 = pneg %p67
        $region50: #{state_encoder_forward.1} parent=43 // pred_check_branch
          %285 = sbr.rel (%p283) target = $region52
        $region51: #{state_encoder_forward.1} parent=43 // pred_region
          %286 = dma.done [#allocation6], 384
        $region52: #{state_encoder_forward.1} parent=43 // pred_fallthru
          _
        // Predicated region
        $region53: #{state_encoder_forward.1} parent=43 // pred_check
          %p287 = pneg %p88
        $region54: #{state_encoder_forward.1} parent=43 // pred_check_branch
          %289 = sbr.rel (%p287) target = $region56
        $region55: #{state_encoder_forward.1} parent=43 // pred_region
          %290 = dma.done [#allocation6], 128
        $region56: #{state_encoder_forward.1} parent=43 // pred_fallthru
          _
        // Predicated region
        $region57: #{state_encoder_forward.1} parent=43 // pred_check
          %p291 = pneg %p109
        $region58: #{state_encoder_forward.1} parent=43 // pred_check_branch
          %293 = sbr.rel (%p291) target = $region60
        $region59: #{state_encoder_forward.1} parent=43 // pred_region
          %294 = dma.done [#allocation9], 1024
        $region60: #{state_encoder_forward.1} parent=43 // pred_fallthru
          _
        // Predicated region
        $region61: #{state_encoder_forward.1} parent=43 // pred_check
          %p295 = pneg %p130
        $region62: #{state_encoder_forward.1} parent=43 // pred_check_branch
          %297 = sbr.rel (%p295) target = $region64
        $region63: #{state_encoder_forward.1} parent=43 // pred_region
          %298 = dma.done [#allocation9], 1024
        $region64: #{state_encoder_forward.1} parent=43 // pred_fallthru
          _
        %s299 = sand.u32 %s33, 1
        %s300 = scalar_lea.sflag [#allocation3], %s299
        %s301 = sand.u32 %s33, 1
        %s302 = smul.addr %s301, 8
        %s303 = scalar_lea.vmem [#allocation2], %s302
        %p304 = pneg %p46
        %p305 = pneg %p43
        %p306 = pneg %p67
        %p307 = pneg %p64
        %p308 = pneg %p88
        %p309 = pneg %p85
        %p310 = pneg %p109
        %p311 = pneg %p106
        %p312 = pneg %p130
        %p313 = pneg %p127
        %p314 = pneg %p151
        %p315 = pneg %p148
        %p316 = pneg %p177
        %p317 = pneg %p174
        %s318 = sand.u32 %s164, 1
        %s319 = scalar_lea.sflag [#allocation4], %s318
        %s320 = sand.u32 %s164, 1
        %s321 = smul.addr %s320, 8
        %s322 = scalar_lea.vmem [#allocation11], %s321
        %v323 = vld [vmem:[#allocation7] sm:$0xff]
        %v324 = vld [vmem:[%s278] sm:$0xff]
        %v325 = vld [vmem:[#allocation5] sm:$0xff]
        %v326 = vld [vmem:[#allocation5 + $0x8] sm:$0xff]
        %v327 = vld [vmem:[#allocation5 + $0x10] sm:$0xff]
        %v328 = vlaneseq
        %v329 = vshrl.u32 %v328, 7
        %v330 = vsub.s32 0, %v329
        %v331 = vrot.slane %v323, %v330
        %vm332 = vcmask 195584
        %v334 = vsel %vm332, %v324, 0
        %336 = vmatprep.subr.mxu0 0.0
        %337 = vmatpush1.msra.mxu0 0.0
        %338 = vmatprep.subr.mxu0 0.0
        %339 = vmatpush1.msra.mxu0 0.0
        %340 = vmatprep.subr.mxu0 0.0
        %341 = vmatpush1.msra.mxu0 0.0
        %342 = vmatprep.subr.mxu0 0.0
        %343 = vmatpush1.msra.mxu0 0.0
        %344 = vmatprep.subr.mxu0 0.0
        %345 = vmatpush1.msra.mxu0 0.0
        %346 = vmatprep.subr.mxu0 0.0
        %347 = vmatpush1.msra.mxu0 0.0
        %348 = vmatprep.subr.mxu0 0.0
        %349 = vmatpush1.msra.mxu0 0.0
        %350 = vmatprep.subr.mxu0 0.0
        %351 = vmatpush1.msra.mxu0 0.0
        %352 = vmatprep.subr.mxu0 0.0
        %353 = vmatpush1.msra.mxu0 0.0
        %354 = vmatprep.subr.mxu0 0.0
        %355 = vmatpush1.msra.mxu0 0.0
        %356 = vmatprep.subr.mxu0 0.0
        %357 = vmatpush1.msra.mxu0 0.0
        %358 = vmatprep.subr.mxu0 0.0
        %359 = vmatpush1.msra.mxu0 0.0
        %360 = vmatprep.subr.mxu0 0.0
        %361 = vmatpush1.msra.mxu0 0.0
        %362 = vmatprep.subr.mxu0 0.0
        %363 = vmatpush1.msra.mxu0 %v327
        %364 = vmatprep.subr.mxu0 0.0
        %365 = vmatpush1.msra.mxu0 %v326
        %366 = vmatprep.subr.mxu0 0.0
        %367 = vmatpush1.msra.mxu0 %v325
        %368 = vmatprep.subr.mxu0 0.0
        %369 = vmatpush2.msra.mxu0 0.0
        %370 = vmatprep.subr.mxu0 0.0
        %371 = vmatpush2.msra.mxu0 0.0
        %372 = vmatprep.subr.mxu0 0.0
        %373 = vmatpush2.msra.mxu0 0.0
        %374 = vmatprep.subr.mxu0 0.0
        %375 = vmatpush2.msra.mxu0 0.0
        %376 = vmatprep.subr.mxu0 0.0
        %377 = vmatpush2.msra.mxu0 0.0
        %378 = vmatprep.subr.mxu0 0.0
        %379 = vmatpush2.msra.mxu0 0.0
        %380 = vmatprep.subr.mxu0 0.0
        %381 = vmatpush2.msra.mxu0 0.0
        %382 = vmatprep.subr.mxu0 0.0
        %383 = vmatpush2.msra.mxu0 0.0
        %384 = vmatprep.subr.mxu0 0.0
        %385 = vmatpush2.msra.mxu0 0.0
        %386 = vmatprep.subr.mxu0 0.0
        %387 = vmatpush2.msra.mxu0 0.0
        %388 = vmatprep.subr.mxu0 0.0
        %389 = vmatpush2.msra.mxu0 0.0
        %390 = vmatprep.subr.mxu0 0.0
        %391 = vmatpush2.msra.mxu0 0.0
        %392 = vmatprep.subr.mxu0 0.0
        %393 = vmatpush2.msra.mxu0 0.0
        %394 = vmatprep.subr.mxu0 0.0
        %395 = vmatpush2.msra.mxu0 0.0
        %396 = vmatprep.subr.mxu0 0.0
        %397 = vmatpush2.msra.mxu0 0.0
        %398 = vmatprep.subr.mxu0 0.0
        %399 = vmatpush2.msra.mxu0 0.0
        %400 = vmatprep.mubr.f32.mxu0 0.0
        %401 = vmatmul.mubr.f32.gmra.mxu0 %v334
        %v402 = vpop.f32.mrf.mxu0
        %v403 = vadd.f32 %v331, %v402
        %v404 = vpop.f32.mrf.mxu0
        %405 = vdwg.mxu0
        %vm406 = vcmask 523264
        %v407 = vsel %vm406, %v403, 0.0
        %408 = vadd.xlane.f32.xlu0 %v407
        %v409 = vpop.xlane.xlu0 %408
        %v410 = vrcp.pop 64.0
        %v411 = vmul.f32 %v409, %v410
        %v412 = vsub.f32 %v403, %v411
        %v413 = vmul.f32 %v412, %v412
        %v414 = vsel %vm406, %v413, 0.0
        %415 = vadd.xlane.f32.xlu0 %v414
        %v416 = vpop.xlane.xlu0 %415
        %v417 = vmul.f32 %v416, %v410
        %v418 = vadd.f32 %v417, 1e-05
        %v419 = vrsqrt.pop %v418
        %v420 = vmul.f32 %v412, %v419
        %v421 = vlaneseq
        %v422 = vshrl.u32 %v421, 7
        %v423 = vsub.s32 1, %v422
        %v424 = vrot.slane %v323, %v423
        %v425 = vmul.f32 %v420, %v424
        %v426 = vlaneseq
        %v427 = vshrl.u32 %v426, 7
        %v428 = vsub.s32 2, %v427
        %v429 = vrot.slane %v323, %v428
        %v430 = vadd.f32 %v425, %v429
        %v431 = vmax.f32 %v430, 0.0
        %v432 = vld [vmem:[#allocation8] sm:$0xff]
        %v433 = vld [vmem:[#allocation8 + $0x8] sm:$0xff]
        %v434 = vld [vmem:[#allocation8 + $0x10] sm:$0xff]
        %v435 = vld [vmem:[#allocation8 + $0x18] sm:$0xff]
        %v436 = vld [vmem:[#allocation8 + $0x20] sm:$0xff]
        %v437 = vld [vmem:[#allocation8 + $0x28] sm:$0xff]
        %v438 = vld [vmem:[#allocation8 + $0x30] sm:$0xff]
        %v439 = vld [vmem:[#allocation8 + $0x38] sm:$0xff]
        %v440 = vlaneseq
        %v441 = vshrl.u32 %v440, 7
        %v442 = vsub.s32 3, %v441
        %v443 = vrot.slane %v323, %v442
        %v445 = vsel %vm406, %v431, 0
        %447 = vmatprep.subr.mxu0 0.0
        %448 = vmatpush1.msra.mxu0 0.0
        %449 = vmatprep.subr.mxu0 0.0
        %450 = vmatpush1.msra.mxu0 0.0
        %451 = vmatprep.subr.mxu0 0.0
        %452 = vmatpush1.msra.mxu0 0.0
        %453 = vmatprep.subr.mxu0 0.0
        %454 = vmatpush1.msra.mxu0 0.0
        %455 = vmatprep.subr.mxu0 0.0
        %456 = vmatpush1.msra.mxu0 0.0
        %457 = vmatprep.subr.mxu0 0.0
        %458 = vmatpush1.msra.mxu0 0.0
        %459 = vmatprep.subr.mxu0 0.0
        %460 = vmatpush1.msra.mxu0 0.0
        %461 = vmatprep.subr.mxu0 0.0
        %462 = vmatpush1.msra.mxu0 0.0
        %463 = vmatprep.subr.mxu0 0.0
        %464 = vmatpush1.msra.mxu0 %v439
        %465 = vmatprep.subr.mxu0 0.0
        %466 = vmatpush1.msra.mxu0 %v438
        %467 = vmatprep.subr.mxu0 0.0
        %468 = vmatpush1.msra.mxu0 %v437
        %469 = vmatprep.subr.mxu0 0.0
        %470 = vmatpush1.msra.mxu0 %v436
        %471 = vmatprep.subr.mxu0 0.0
        %472 = vmatpush1.msra.mxu0 %v435
        %473 = vmatprep.subr.mxu0 0.0
        %474 = vmatpush1.msra.mxu0 %v434
        %475 = vmatprep.subr.mxu0 0.0
        %476 = vmatpush1.msra.mxu0 %v433
        %477 = vmatprep.subr.mxu0 0.0
        %478 = vmatpush1.msra.mxu0 %v432
        %479 = vmatprep.subr.mxu0 0.0
        %480 = vmatpush2.msra.mxu0 0.0
        %481 = vmatprep.subr.mxu0 0.0
        %482 = vmatpush2.msra.mxu0 0.0
        %483 = vmatprep.subr.mxu0 0.0
        %484 = vmatpush2.msra.mxu0 0.0
        %485 = vmatprep.subr.mxu0 0.0
        %486 = vmatpush2.msra.mxu0 0.0
        %487 = vmatprep.subr.mxu0 0.0
        %488 = vmatpush2.msra.mxu0 0.0
        %489 = vmatprep.subr.mxu0 0.0
        %490 = vmatpush2.msra.mxu0 0.0
        %491 = vmatprep.subr.mxu0 0.0
        %492 = vmatpush2.msra.mxu0 0.0
        %493 = vmatprep.subr.mxu0 0.0
        %494 = vmatpush2.msra.mxu0 0.0
        %495 = vmatprep.subr.mxu0 0.0
        %496 = vmatpush2.msra.mxu0 0.0
        %497 = vmatprep.subr.mxu0 0.0
        %498 = vmatpush2.msra.mxu0 0.0
        %499 = vmatprep.subr.mxu0 0.0
        %500 = vmatpush2.msra.mxu0 0.0
        %501 = vmatprep.subr.mxu0 0.0
        %502 = vmatpush2.msra.mxu0 0.0
        %503 = vmatprep.subr.mxu0 0.0
        %504 = vmatpush2.msra.mxu0 0.0
        %505 = vmatprep.subr.mxu0 0.0
        %506 = vmatpush2.msra.mxu0 0.0
        %507 = vmatprep.subr.mxu0 0.0
        %508 = vmatpush2.msra.mxu0 0.0
        %509 = vmatprep.subr.mxu0 0.0
        %510 = vmatpush2.msra.mxu0 0.0
        %511 = vmatprep.mubr.f32.mxu0 0.0
        %512 = vmatmul.mubr.f32.gmra.mxu0 %v445
        %v513 = vpop.f32.mrf.mxu0
        %v514 = vadd.f32 %v443, %v513
        %v515 = vpop.f32.mrf.mxu0
        %516 = vdwg.mxu0
        %v517 = vsel %vm406, %v514, 0.0
        %518 = vadd.xlane.f32.xlu0 %v517
        %v519 = vpop.xlane.xlu0 %518
        %v520 = vmul.f32 %v519, %v410
        %v521 = vsub.f32 %v514, %v520
        %v522 = vmul.f32 %v521, %v521
        %v523 = vsel %vm406, %v522, 0.0
        %524 = vadd.xlane.f32.xlu0 %v523
        %v525 = vpop.xlane.xlu0 %524
        %v526 = vmul.f32 %v525, %v410
        %v527 = vadd.f32 %v526, 1e-05
        %v528 = vrsqrt.pop %v527
        %v529 = vmul.f32 %v521, %v528
        %v530 = vlaneseq
        %v531 = vshrl.u32 %v530, 7
        %v532 = vsub.s32 4, %v531
        %v533 = vrot.slane %v323, %v532
        %v534 = vmul.f32 %v529, %v533
        %v535 = vlaneseq
        %v536 = vshrl.u32 %v535, 7
        %v537 = vsub.s32 5, %v536
        %v538 = vrot.slane %v323, %v537
        %v539 = vadd.f32 %v534, %v538
        %v540 = vmax.f32 %v539, 0.0
        %v541 = vld [vmem:[#allocation10] sm:$0xff]
        %v542 = vld [vmem:[#allocation10 + $0x8] sm:$0xff]
        %v543 = vld [vmem:[#allocation10 + $0x10] sm:$0xff]
        %v544 = vld [vmem:[#allocation10 + $0x18] sm:$0xff]
        %v545 = vld [vmem:[#allocation10 + $0x20] sm:$0xff]
        %v546 = vld [vmem:[#allocation10 + $0x28] sm:$0xff]
        %v547 = vld [vmem:[#allocation10 + $0x30] sm:$0xff]
        %v548 = vld [vmem:[#allocation10 + $0x38] sm:$0xff]
        %v549 = vld [vmem:[%s5] sm:$0x1]
        %v551 = vlaneseq
        %v552 = vshrl.u32 %v551, 7
        %v553 = vsub.s32 0, %v552
        %v554 = vrot.slane %v549, %v553
        %v557 = vsel %vm406, %v540, 0
        %559 = vmatprep.subr.mxu0 0.0
        %560 = vmatpush1.msra.mxu0 0.0
        %561 = vmatprep.subr.mxu0 0.0
        %562 = vmatpush1.msra.mxu0 0.0
        %563 = vmatprep.subr.mxu0 0.0
        %564 = vmatpush1.msra.mxu0 0.0
        %565 = vmatprep.subr.mxu0 0.0
        %566 = vmatpush1.msra.mxu0 0.0
        %567 = vmatprep.subr.mxu0 0.0
        %568 = vmatpush1.msra.mxu0 0.0
        %569 = vmatprep.subr.mxu0 0.0
        %570 = vmatpush1.msra.mxu0 0.0
        %571 = vmatprep.subr.mxu0 0.0
        %572 = vmatpush1.msra.mxu0 0.0
        %573 = vmatprep.subr.mxu0 0.0
        %574 = vmatpush1.msra.mxu0 0.0
        %575 = vmatprep.subr.mxu0 0.0
        %576 = vmatpush1.msra.mxu0 %v548
        %577 = vmatprep.subr.mxu0 0.0
        %578 = vmatpush1.msra.mxu0 %v547
        %579 = vmatprep.subr.mxu0 0.0
        %580 = vmatpush1.msra.mxu0 %v546
        %581 = vmatprep.subr.mxu0 0.0
        %582 = vmatpush1.msra.mxu0 %v545
        %583 = vmatprep.subr.mxu0 0.0
        %584 = vmatpush1.msra.mxu0 %v544
        %585 = vmatprep.subr.mxu0 0.0
        %586 = vmatpush1.msra.mxu0 %v543
        %587 = vmatprep.subr.mxu0 0.0
        %588 = vmatpush1.msra.mxu0 %v542
        %589 = vmatprep.subr.mxu0 0.0
        %590 = vmatpush1.msra.mxu0 %v541
        %591 = vmatprep.subr.mxu0 0.0
        %592 = vmatpush2.msra.mxu0 0.0
        %593 = vmatprep.subr.mxu0 0.0
        %594 = vmatpush2.msra.mxu0 0.0
        %595 = vmatprep.subr.mxu0 0.0
        %596 = vmatpush2.msra.mxu0 0.0
        %597 = vmatprep.subr.mxu0 0.0
        %598 = vmatpush2.msra.mxu0 0.0
        %599 = vmatprep.subr.mxu0 0.0
        %600 = vmatpush2.msra.mxu0 0.0
        %601 = vmatprep.subr.mxu0 0.0
        %602 = vmatpush2.msra.mxu0 0.0
        %603 = vmatprep.subr.mxu0 0.0
        %604 = vmatpush2.msra.mxu0 0.0
        %605 = vmatprep.subr.mxu0 0.0
        %606 = vmatpush2.msra.mxu0 0.0
        %607 = vmatprep.subr.mxu0 0.0
        %608 = vmatpush2.msra.mxu0 0.0
        %609 = vmatprep.subr.mxu0 0.0
        %610 = vmatpush2.msra.mxu0 0.0
        %611 = vmatprep.subr.mxu0 0.0
        %612 = vmatpush2.msra.mxu0 0.0
        %613 = vmatprep.subr.mxu0 0.0
        %614 = vmatpush2.msra.mxu0 0.0
        %615 = vmatprep.subr.mxu0 0.0
        %616 = vmatpush2.msra.mxu0 0.0
        %617 = vmatprep.subr.mxu0 0.0
        %618 = vmatpush2.msra.mxu0 0.0
        %619 = vmatprep.subr.mxu0 0.0
        %620 = vmatpush2.msra.mxu0 0.0
        %621 = vmatprep.subr.mxu0 0.0
        %622 = vmatpush2.msra.mxu0 0.0
        %623 = vmatprep.mubr.f32.mxu0 0.0
        %624 = vmatmul.mubr.f32.gmra.mxu0 %v557
        %v625 = vpop.f32.mrf.mxu0
        %v626 = vadd.f32 %v554, %v625
        %v627 = vpop.f32.mrf.mxu0
        %628 = vdwg.mxu0
        %v629 = vtanh.pop %v626
        %630 = vst [vmem:[%s322] sm:$0xff] %v629
        %s631 = sand.u32 %s164, 1
        %s632 = scalar_lea.sflag [#allocation4], %s631
        %s633 = sand.u32 %s164, 1
        %s634 = smul.addr %s633, 8
        %s635 = scalar_lea.vmem [#allocation11], %s634
        // Predicated region
        $region65: #{state_encoder_forward.1} parent=43 // pred_check
          %p636 = pneg %p174
        $region66: #{state_encoder_forward.1} parent=43 // pred_check_branch
          %638 = sbr.rel (%p636) target = $region68
        $region67: #{state_encoder_forward.1} parent=43 // pred_region
          %s640 = ssub.s32 128, 128
          %641 = vsyncadd %s632, %s640
          %s642 = smul.addr %s25, 128
          %s643 = scalar_lea.hbm %s6, %s642
          %s645 = sshll.u32 %s635, 4
          %s646 = int_to_ptr.vmem [resolvable:$true] %s645
          %648 = dma.vmem_to_hbm [thread:$0]  %s646, 128, %s643, %s632
        $region68: #{state_encoder_forward.1} parent=43 // pred_fallthru
          _
      $region44: #{state_encoder_forward.1} parent=5 // pred_fallthru
        _
      %p649 = scmp.le.s32.totalorder 2, %s20
      // Predicated region
      $region69: #{state_encoder_forward.1} parent=5 // pred_check
        %p650 = pneg %p649
      $region70: #{state_encoder_forward.1} parent=5 // pred_check_branch
        %652 = sbr.rel (%p650) target = $region72
      $region71: #{state_encoder_forward.1} parent=5 // pred_region
        %s653 = ssub.s32 %s20, 2
        // Predicated region
        $region73: #{state_encoder_forward.1} parent=71 // pred_check
          %p654 = pneg %p180
        $region74: #{state_encoder_forward.1} parent=71 // pred_check_branch
          %656 = sbr.rel (%p654) target = $region76
        $region75: #{state_encoder_forward.1} parent=71 // pred_region
          %s657 = sand.u32 %s165, 1
          %s658 = scalar_lea.sflag [#allocation4], %s657
          %s659 = sand.u32 %s165, 1
          %s660 = smul.addr %s659, 8
          %s661 = scalar_lea.vmem [#allocation11], %s660
          %662 = dma.done %s658, 128
        $region76: #{state_encoder_forward.1} parent=71 // pred_fallthru
          _
      $region72: #{state_encoder_forward.1} parent=5 // pred_fallthru
        _
    $region6: #{state_encoder_forward.1} parent=1 // loop_footer
      %s24 = sadd.s32 1, %s20
    $region7: #{state_encoder_forward.1} parent=1 // loop_footer_branch
      %19 = sbr.rel target = $region3
    $region8: #{state_encoder_forward.1} parent=1 // loop_exit
      _
    %663 = vsyncpa [#allocation3], 1
    %s664 = scalar_lea.sflag [#allocation3], 1
    %665 = vsyncpa %s664, 1
    %666 = vsyncpa [#allocation6], 1
    %667 = vsyncpa [#allocation9], 1
    %668 = vsyncpa [#allocation4], 1
    %s669 = scalar_lea.sflag [#allocation4], 1
    %670 = vsyncpa %s669, 1

</llo_original>
